<compile_context>
chip_gen: v7x
topology: tpu7x:2x2x1
jax: 0.10.0
libtpu: 0.0.40
codegen_flags: <defaults>
</compile_context>

<pallas_src>
import jax
import jax.numpy as jnp
from jax.experimental import pallas as pl
from jax.experimental.pallas import tpu as pltpu


def _attention_kernel(v_ref, b_ref, trg_ref, score_ref, value_ref, acc_ref):
    i = pl.program_id(0)

    @pl.when(i == 0)
    def _init():
        acc_ref[...] = jnp.zeros_like(acc_ref)

    trg = trg_ref[...]                 # (bt, Dt), native dtype
    v = v_ref[...]                     # (1, Dt),  same dtype as trg
    b = b_ref[0]                       # scalar bias, read from SMEM

    # Bilinear with a single output feature, lane-dense:
    #   raw[0, t] = <src @ W, trg[t]> + b
    # Contract on the last dims (trans-B matmul) -> no explicit transpose.
    raw = jax.lax.dot_general(
        v, trg, (((1,), (1,)), ((), ())),
        preferred_element_type=jnp.float32) + b            # (1, bt) f32

    # nn.Softmax(dim=-1) over the original (T, 1) scores: each row normalises a
    # single element, so softmax(x) = exp(x - x) / exp(x - x) = 1.0 exactly for
    # finite x (the denominator equals the numerator, so the divide is
    # omitted); NaN/Inf inputs still propagate as NaN, as in torch.
    s = jnp.exp(raw - raw)                                  # (1, bt), == 1.0

    # Lane-dense score block of the (1, T_pad) output (unmasked vst).
    score_ref[...] = s

    # value = score^T @ trg, accumulated across T tiles.  M=1 matmul: the
    # kernel is memory-bound so MXU under-utilisation is irrelevant, and this
    # avoids a (bt,1)->(1,bt) relayout.
    acc_ref[...] += jnp.dot(s.astype(trg.dtype), trg,
                            preferred_element_type=jnp.float32)

    @pl.when(i == pl.num_programs(0) - 1)
    def _store():
        value_ref[...] = acc_ref[...].astype(value_ref.dtype)


def _round_up(x, m):
    return (x + m - 1) // m * m


def attention_forward(src, W, b, trg):
    """src: (src_size,), W: (src_size, trg_size), b: scalar, trg: (T, trg_size)."""
    T, trg_size = trg.shape

    # Grid-invariant half of the bilinear, hoisted out of the kernel.
    v = jnp.dot(src.astype(jnp.float32), W.astype(jnp.float32))
    v = v.reshape(1, trg_size).astype(trg.dtype)
    b_smem = jnp.asarray(b, jnp.float32).reshape(1)

    # Tile T.  Small T: one 8-aligned block (full-extent last-dim rule covers
    # the lane constraint).  Large T: blocks that are a multiple of 128 rows
    # (lane-dense score stores) and fit a ~4 MiB/tile VMEM budget when trg is
    # wide, capped at 2048 rows to keep double-buffering cheap.
    if T <= 2048:
        block_t = max(8, _round_up(T, 8))
    else:
        itemsize = jnp.dtype(trg.dtype).itemsize
        budget_rows = (4 * 1024 * 1024) // max(trg_size * itemsize, 1)
        block_t = min(2048, max(128, (budget_rows // 128) * 128))
    t_pad = _round_up(T, block_t)
    trg_p = jnp.pad(trg, ((0, t_pad - T), (0, 0))) if t_pad != T else trg
    grid = (t_pad // block_t,)

    score_row, value = pl.pallas_call(
        _attention_kernel,
        out_shape=(
            jax.ShapeDtypeStruct((1, t_pad), jnp.float32),      # lane-dense scores
            jax.ShapeDtypeStruct((1, trg_size), jnp.float32),   # value
        ),
        grid=grid,
        in_specs=[
            pl.BlockSpec((1, trg_size), lambda i: (0, 0)),            # v (resident)
            pl.BlockSpec(memory_space=pltpu.MemorySpace.SMEM),        # bias scalar
            pl.BlockSpec((block_t, trg_size), lambda i: (i, 0)),      # trg tile
        ],
        out_specs=(
            pl.BlockSpec((1, block_t), lambda i: (0, i)),             # score row
            pl.BlockSpec((1, trg_size), lambda i: (0, 0)),            # value (resident acc)
        ),
        scratch_shapes=[pltpu.VMEM((1, trg_size), jnp.float32)],
        compiler_params=pltpu.CompilerParams(
            # The T axis carries the value reduction (resident accumulator),
            # so it must be "arbitrary", not "parallel".
            dimension_semantics=("arbitrary",),
        ),
    )(v, b_smem, trg_p)

    # Back to the module's layout: (T, 1) scores, then torch-style squeeze(0).
    score2d = score_row[:, :T].T                            # (T, 1)
    score_out = jnp.squeeze(score2d, axis=0) if T == 1 else score2d
    value_out = jnp.squeeze(value, axis=0)                  # (trg_size,)
    return score_out, value_out


def attention_reference(src, W, b, trg):
    """Pure-JAX reference of the same forward."""
    raw = trg @ (src @ W) + b                  # (T,)
    s = jax.nn.softmax(raw[:, None], axis=-1)  # (T, 1) -> exactly 1.0 per row
    value = s.T @ trg                          # (1, Dt)
    T = trg.shape[0]
    score_out = jnp.squeeze(s, axis=0) if T == 1 else s
    return score_out, jnp.squeeze(value, axis=0)


if __name__ == "__main__":
    key = jax.random.PRNGKey(0)
    k_src, k_w, k_b, k_t1, k_t2, k_t3 = jax.random.split(key, 6)

    src_size, trg_size = 32, 32
    src = jax.random.normal(k_src, (src_size,), dtype=jnp.float32)
    W = jax.random.normal(k_w, (src_size, trg_size), dtype=jnp.float32) * 0.1
    b = jax.random.normal(k_b, (), dtype=jnp.float32) * 0.1

    # Small case (single 8-aligned block), a medium case (single larger block),
    # and a large case exercising the T grid, zero-padding and the value
    # accumulation across tiles.
    for T, k in ((8, k_t1), (600, k_t2), (5000, k_t3)):
        trg = jax.random.normal(k, (T, trg_size), dtype=jnp.float32)

        score, value = attention_forward(src, W, b, trg)
        jax.block_until_ready((score, value))

        ref_score, ref_value = attention_reference(src, W, b, trg)
        assert score.shape == ref_score.shape, (score.shape, ref_score.shape)
        assert value.shape == ref_value.shape, (value.shape, ref_value.shape)
        assert jnp.allclose(score, ref_score, atol=1e-5)
        assert jnp.allclose(value, ref_value, atol=1e-4, rtol=1e-5)

    print("KERNEL_OK")
</pallas_src>

<mosaic_0001>
module attributes {stable_mosaic.version = 11 : i64} {
  func.func @_attention_kernel(%arg0: i32, %arg1: memref<1x32xf32, #tpu.memory_space<vmem>>, %arg2: memref<1xf32, #tpu.memory_space<smem>>, %arg3: memref<8x32xf32, #tpu.memory_space<vmem>>, %arg4: memref<1x8xf32, #tpu.memory_space<vmem>>, %arg5: memref<1x32xf32, #tpu.memory_space<vmem>>, %arg6: memref<1x32xf32, #tpu.memory_space<vmem>>) attributes {dimension_semantics = [#tpu.dimension_semantics<arbitrary>], iteration_bounds = array<i64: 1>, scalar_prefetch = 0 : i64, scratch_operands = 1 : i64, tpu.core_type = #tpu.core_type<tc>, window_params = [{pipeline_mode = #tpu.pipeline_mode<synchronous>, transform_indices = @transform_0, window_bounds = array<i64: 1, 32>}, {transform_indices = @transform_1, window_bounds = array<i64: 1>}, {transform_indices = @transform_2, window_bounds = array<i64: 8, 32>}, {transform_indices = @transform_3, window_bounds = array<i64: 1, 8>}, {pipeline_mode = #tpu.pipeline_mode<synchronous>, transform_indices = @transform_4, window_bounds = array<i64: 1, 32>}]} {
    %c0_i32 = arith.constant 0 : i32
    %0 = arith.cmpi eq, %arg0, %c0_i32 : i32
    %1 = arith.extui %0 : i1 to i32
    %c0_i32_0 = arith.constant 0 : i32
    %2 = arith.cmpi ne, %1, %c0_i32_0 : i32
    scf.if %2 {
      %cst_14 = arith.constant 0.000000e+00 : f32
      %19 = vector.broadcast %cst_14 : f32 to vector<1x32xf32>
      %c0_15 = arith.constant 0 : index
      %c0_16 = arith.constant 0 : index
      %20 = vector.load %arg6[%c0_15, %c0_16] : memref<1x32xf32, #tpu.memory_space<vmem>>, vector<1x32xf32>
      tpu.vector_store %arg6[%c0_15, %c0_16], %19 {strides = array<i32>} : memref<1x32xf32, #tpu.memory_space<vmem>>, vector<1x32xf32>,
    } else {
    }
    %c0 = arith.constant 0 : index
    %c0_1 = arith.constant 0 : index
    %3 = vector.load %arg3[%c0, %c0_1] : memref<8x32xf32, #tpu.memory_space<vmem>>, vector<8x32xf32>
    %c0_2 = arith.constant 0 : index
    %c0_3 = arith.constant 0 : index
    %4 = vector.load %arg1[%c0_2, %c0_3] : memref<1x32xf32, #tpu.memory_space<vmem>>, vector<1x32xf32>
    %c0_4 = arith.constant 0 : index
    %5 = memref.load %arg2[%c0_4] : memref<1xf32, #tpu.memory_space<smem>>
    %cst = arith.constant dense<0.000000e+00> : vector<1x8xf32>
    %6 = tpu.matmul %4, %3, %cst {dimension_numbers = #tpu.dot_dimension_numbers<[1], [1], [0], [0], [0, 0, 1, 0], [], []>} : vector<1x32xf32>, vector<8x32xf32>, vector<1x8xf32> -> vector<1x8xf32>
    %7 = vector.broadcast %5 : f32 to vector<1x8xf32>
    %8 = arith.addf %6, %7 : vector<1x8xf32>
    %9 = arith.subf %8, %8 : vector<1x8xf32>
    %10 = math.exp %9 : vector<1x8xf32>
    %c0_5 = arith.constant 0 : index
    %c0_6 = arith.constant 0 : index
    %11 = vector.load %arg4[%c0_5, %c0_6] : memref<1x8xf32, #tpu.memory_space<vmem>>, vector<1x8xf32>
    tpu.vector_store %arg4[%c0_5, %c0_6], %10 {strides = array<i32>} : memref<1x8xf32, #tpu.memory_space<vmem>>, vector<1x8xf32>,
    %c0_7 = arith.constant 0 : index
    %c0_8 = arith.constant 0 : index
    %12 = vector.load %arg6[%c0_7, %c0_8] : memref<1x32xf32, #tpu.memory_space<vmem>>, vector<1x32xf32>
    %cst_9 = arith.constant dense<0.000000e+00> : vector<1x32xf32>
    %13 = tpu.matmul %10, %3, %cst_9 {dimension_numbers = #tpu.dot_dimension_numbers<[1], [0], [0], [1], [0, 0, 1, 1], [], []>} : vector<1x8xf32>, vector<8x32xf32>, vector<1x32xf32> -> vector<1x32xf32>
    %14 = arith.addf %12, %13 : vector<1x32xf32>
    %c0_10 = arith.constant 0 : index
    %c0_11 = arith.constant 0 : index
    %15 = vector.load %arg6[%c0_10, %c0_11] : memref<1x32xf32, #tpu.memory_space<vmem>>, vector<1x32xf32>
    tpu.vector_store %arg6[%c0_10, %c0_11], %14 {strides = array<i32>} : memref<1x32xf32, #tpu.memory_space<vmem>>, vector<1x32xf32>,
    %c0_i32_12 = arith.constant 0 : i32
    %16 = arith.cmpi eq, %arg0, %c0_i32_12 : i32
    %17 = arith.extui %16 : i1 to i32
    %c0_i32_13 = arith.constant 0 : i32
    %18 = arith.cmpi ne, %17, %c0_i32_13 : i32
    scf.if %18 {
      %c0_14 = arith.constant 0 : index
      %c0_15 = arith.constant 0 : index
      %19 = vector.load %arg6[%c0_14, %c0_15] : memref<1x32xf32, #tpu.memory_space<vmem>>, vector<1x32xf32>
      %c0_16 = arith.constant 0 : index
      %c0_17 = arith.constant 0 : index
      %20 = vector.load %arg5[%c0_16, %c0_17] : memref<1x32xf32, #tpu.memory_space<vmem>>, vector<1x32xf32>
      tpu.vector_store %arg5[%c0_16, %c0_17], %19 {strides = array<i32>} : memref<1x32xf32, #tpu.memory_space<vmem>>, vector<1x32xf32>,
    } else {
    }
    return
  }
  func.func @transform_0(%arg0: i32) -> (i32, i32) {
    %c0_i32 = arith.constant 0 : i32
    %c0_i32_0 = arith.constant 0 : i32
    %c0_i32_1 = arith.constant 0 : i32
    return %c0_i32, %c0_i32_0 : i32, i32
  }
  func.func @transform_1(%arg0: i32) -> i32 {
    %c0_i32 = arith.constant 0 : i32
    %c0_i32_0 = arith.constant 0 : i32
    return %c0_i32 : i32
  }
  func.func @transform_2(%arg0: i32) -> (i32, i32) {
    %c0_i32 = arith.constant 0 : i32
    %c0_i32_0 = arith.constant 0 : i32
    return %arg0, %c0_i32 : i32, i32
  }
  func.func @transform_3(%arg0: i32) -> (i32, i32) {
    %c0_i32 = arith.constant 0 : i32
    %c0_i32_0 = arith.constant 0 : i32
    return %c0_i32, %arg0 : i32, i32
  }
  func.func @transform_4(%arg0: i32) -> (i32, i32) {
    %c0_i32 = arith.constant 0 : i32
    %c0_i32_0 = arith.constant 0 : i32
    %c0_i32_1 = arith.constant 0 : i32
    return %c0_i32, %c0_i32_0 : i32, i32
  }
}

</mosaic_0001>

<llo_original>
// kernel: tpu_custom_call.1
$region0: #{tpu_custom_call.1}
  #allocation0 [shape = 'u32[]', space=smem, size = 0x4, offset = 0x4, fixed_abs, tag = 'smem constant byte address 0x4 - core index']
  #allocation1 [shape = 'u32[144,128]{1,0:T(1,128)}', space=vmem, size = 0x12000, scoped, tag = 'internal scratch']
  #allocation2 [shape = 'f32[1,32]{1,0:T(1,128)}', space=vmem, size = 0x200, scoped, tag = 'scratch operand']
  #allocation3 [shape = 'f32[1]{0:T(128)S(6)}', space=smem, size = 0x200, scoped, tag = 'scoped memory for tpu_custom_call.1']
  %s0 = inlined_call_operand.vmem [shape: f32[1,32], index: 0, kind: input, shape index: {}]
  %s1 = inlined_call_operand.<no memory space> [shape: f32[1], index: 1, kind: input, shape index: {}]
  %s2 = inlined_call_operand.hbm [shape: f32[8,32], index: 2, kind: input, shape index: {}]
  %s3 = inlined_call_operand.hbm [shape: f32[1,8], index: 3, kind: output, shape index: {0}]
  %s4 = inlined_call_operand.hbm [shape: f32[1,32], index: 4, kind: output, shape index: {1}]
  %5 = xla_tuple %s3, %s4
  %s6 = sld [smem:[#allocation0]]
  $region42: #{tpu_custom_call.1} parent=0
    _
  %s8 = ssub.s32 1, %s6
  %s9 = scalar_select 0, %s8, %s6
  %10 = sst [smem:[#allocation3]] %s1
  $region1: #{tpu_custom_call.1} parent=0
    #allocation4 [shape = 'u8[4096]{0}', space=vmem, size = 0x1000, scoped, tag = 'input window, operand 2, single buffered']
    #allocation5 [shape = 's32[1]{0}', space=sflag, size = 0x4, scoped, tag = 'scoped memory for tpu_custom_call.1']
    #allocation6 [shape = 's32[1]{0}', space=sflag, size = 0x4, scoped, tag = 'scoped memory for tpu_custom_call.1']
    #allocation7 [shape = 'u8[512]{0}', space=vmem, size = 0x400, scoped, tag = 'output window, operand 0, single buffered']
    #allocation8 [shape = 'u8[512]{0}', space=vmem, size = 0x400, scoped, tag = 'output window, operand 1, single buffered']
    #allocation9 [shape = 's32[1]{0}', space=sflag, size = 0x4, scoped, tag = 'scoped memory for tpu_custom_call.1']
    %11 = vsyncpa [#allocation5], 0
    %12 = vsyncpa [#allocation6], 0
    %13 = vsyncpa [#allocation9], 0
    // Predicated region
    $region2: #{tpu_custom_call.1} parent=1 // pred_check
      _
    $region3: #{tpu_custom_call.1} parent=1 // pred_check_branch
      %15 = sbr.rel (0) target = $region5
    $region4: #{tpu_custom_call.1} parent=1 // pred_region
      _
    $region5: #{tpu_custom_call.1} parent=1 // pred_fallthru
      _
    // Predicated region
    $region6: #{tpu_custom_call.1} parent=1 // pred_check
      _
    $region7: #{tpu_custom_call.1} parent=1 // pred_check_branch
      %17 = sbr.rel (0) target = $region9
    $region8: #{tpu_custom_call.1} parent=1 // pred_region
      _
    $region9: #{tpu_custom_call.1} parent=1 // pred_fallthru
      _
    // Predicated region
    $region10: #{tpu_custom_call.1} parent=1 // pred_check
      _
    $region11: #{tpu_custom_call.1} parent=1 // pred_check_branch
      %19 = sbr.rel (0) target = $region13
    $region12: #{tpu_custom_call.1} parent=1 // pred_region
      %s21 = ssub.s32 128, 128
      %22 = vsyncadd [#allocation5], %s21
      %s24 = sshll.u32 [#allocation4], 4
      %s25 = int_to_ptr.vmem [resolvable:$true] %s24
      %27 = dma.hbm_to_vmem [thread:$0]  %s2, 128, %s25, [#allocation5]
    $region13: #{tpu_custom_call.1} parent=1 // pred_fallthru
      _
    // Predicated region
    $region14: #{tpu_custom_call.1} parent=1 // pred_check
      _
    $region15: #{tpu_custom_call.1} parent=1 // pred_check_branch
      %29 = sbr.rel (0) target = $region17
    $region16: #{tpu_custom_call.1} parent=1 // pred_region
      %30 = dma.done [#allocation5], 128
    $region17: #{tpu_custom_call.1} parent=1 // pred_fallthru
      _
    %p31 = scmp.eq.s32.totalorder 0, 0
    // Predicated region
    $region18: #{tpu_custom_call.1} parent=1 // pred_check
      %p32 = pneg %p31
    $region19: #{tpu_custom_call.1} parent=1 // pred_check_branch
      %34 = sbr.rel (%p32) target = $region21
    $region20: #{tpu_custom_call.1} parent=1 // pred_region
      %vm35 = vcmask 253952
      %36 = vst.msk [vmem:[#allocation2] sm:$0x1] %vm35, 0.0
    $region21: #{tpu_custom_call.1} parent=1 // pred_fallthru
      _
    %v37 = vld [vmem:[#allocation4] sm:$0xff]
    %v38 = vld [vmem:[%s0] sm:$0x1]
    %s39 = sld [smem:[#allocation3]]
    %v40 = vstv %s39
    %vm41 = vcmask 261120
    %v43 = vsel %vm41, %v38, 0
    %v46 = vsel %vm41, %v37, 0
    %48 = vmatprep.subr.mxu0 0.0
    %49 = vmatpush1.xpose.msra.mxu0 %v46
    %50 = vmatprep.subr.mxu0 0.0
    %51 = vmatpush1.xpose.msra.mxu0 0.0
    %52 = vmatprep.subr.mxu0 0.0
    %53 = vmatpush1.xpose.msra.mxu0 0.0
    %54 = vmatprep.subr.mxu0 0.0
    %55 = vmatpush1.xpose.msra.mxu0 0.0
    %56 = vmatprep.subr.mxu0 0.0
    %57 = vmatpush1.xpose.msra.mxu0 0.0
    %58 = vmatprep.subr.mxu0 0.0
    %59 = vmatpush1.xpose.msra.mxu0 0.0
    %60 = vmatprep.subr.mxu0 0.0
    %61 = vmatpush1.xpose.msra.mxu0 0.0
    %62 = vmatprep.subr.mxu0 0.0
    %63 = vmatpush1.xpose.msra.mxu0 0.0
    %64 = vmatprep.subr.mxu0 0.0
    %65 = vmatpush1.xpose.msra.mxu0 0.0
    %66 = vmatprep.subr.mxu0 0.0
    %67 = vmatpush1.xpose.msra.mxu0 0.0
    %68 = vmatprep.subr.mxu0 0.0
    %69 = vmatpush1.xpose.msra.mxu0 0.0
    %70 = vmatprep.subr.mxu0 0.0
    %71 = vmatpush1.xpose.msra.mxu0 0.0
    %72 = vmatprep.subr.mxu0 0.0
    %73 = vmatpush1.xpose.msra.mxu0 0.0
    %74 = vmatprep.subr.mxu0 0.0
    %75 = vmatpush1.xpose.msra.mxu0 0.0
    %76 = vmatprep.subr.mxu0 0.0
    %77 = vmatpush1.xpose.msra.mxu0 0.0
    %78 = vmatprep.subr.mxu0 0.0
    %79 = vmatpush1.xpose.msra.mxu0 0.0
    %80 = vmatprep.subr.mxu0 0.0
    %81 = vmatpush1.xpose.msra.mxu0 0.0
    %82 = vmatprep.subr.mxu0 0.0
    %83 = vmatpush1.xpose.msra.mxu0 0.0
    %84 = vmatprep.subr.mxu0 0.0
    %85 = vmatpush1.xpose.msra.mxu0 0.0
    %86 = vmatprep.subr.mxu0 0.0
    %87 = vmatpush1.xpose.msra.mxu0 0.0
    %88 = vmatprep.subr.mxu0 0.0
    %89 = vmatpush1.xpose.msra.mxu0 0.0
    %90 = vmatprep.subr.mxu0 0.0
    %91 = vmatpush1.xpose.msra.mxu0 0.0
    %92 = vmatprep.subr.mxu0 0.0
    %93 = vmatpush1.xpose.msra.mxu0 0.0
    %94 = vmatprep.subr.mxu0 0.0
    %95 = vmatpush1.xpose.msra.mxu0 0.0
    %96 = vmatprep.subr.mxu0 0.0
    %97 = vmatpush1.xpose.msra.mxu0 0.0
    %98 = vmatprep.subr.mxu0 0.0
    %99 = vmatpush1.xpose.msra.mxu0 0.0
    %100 = vmatprep.subr.mxu0 0.0
    %101 = vmatpush1.xpose.msra.mxu0 0.0
    %102 = vmatprep.subr.mxu0 0.0
    %103 = vmatpush1.xpose.msra.mxu0 0.0
    %104 = vmatprep.subr.mxu0 0.0
    %105 = vmatpush1.xpose.msra.mxu0 0.0
    %106 = vmatprep.subr.mxu0 0.0
    %107 = vmatpush1.xpose.msra.mxu0 0.0
    %108 = vmatprep.subr.mxu0 0.0
    %109 = vmatpush1.xpose.msra.mxu0 0.0
    %110 = vmatprep.subr.mxu0 0.0
    %111 = vmatpush1.xpose.msra.mxu0 0.0
    %112 = vmatprep.mubr.f32.mxu0 0.0
    %113 = vmatmul.mubr.f32.gmra.mrb[0].mxu0 %v43
    %v114 = vpop.f32.mrb[0].mxu0
    %v115 = vadd.f32 %v40, %v114
    %v116 = vpop.f32.mrb[0].mxu0
    %117 = vdwg.mxu0
    %v118 = vsub.f32 %v115, %v115
    %v119 = vmul.f32 %v118, 1.442695
    %v120 = vpow.pop %v119
    %vm121 = vcmask 57344
    %122 = vst.msk [vmem:[#allocation7] sm:$0x1] %vm121, %v120
    %v123 = vld [vmem:[#allocation2] sm:$0x1]
    %vm124 = vcmask 64512
    %v126 = vsel %vm124, %v120, 0
    %128 = vmatprep.subr.mxu0 0.0
    %129 = vmatpush1.msra.mxu0 %v37
    %130 = vmatprep.subr.mxu0 0.0
    %131 = vmatpush1.msra.mxu0 0.0
    %132 = vmatprep.subr.mxu0 0.0
    %133 = vmatpush1.msra.mxu0 0.0
    %134 = vmatprep.subr.mxu0 0.0
    %135 = vmatpush1.msra.mxu0 0.0
    %136 = vmatprep.subr.mxu0 0.0
    %137 = vmatpush1.msra.mxu0 0.0
    %138 = vmatprep.subr.mxu0 0.0
    %139 = vmatpush1.msra.mxu0 0.0
    %140 = vmatprep.subr.mxu0 0.0
    %141 = vmatpush1.msra.mxu0 0.0
    %142 = vmatprep.subr.mxu0 0.0
    %143 = vmatpush1.msra.mxu0 0.0
    %144 = vmatprep.subr.mxu0 0.0
    %145 = vmatpush1.msra.mxu0 0.0
    %146 = vmatprep.subr.mxu0 0.0
    %147 = vmatpush1.msra.mxu0 0.0
    %148 = vmatprep.subr.mxu0 0.0
    %149 = vmatpush1.msra.mxu0 0.0
    %150 = vmatprep.subr.mxu0 0.0
    %151 = vmatpush1.msra.mxu0 0.0
    %152 = vmatprep.subr.mxu0 0.0
    %153 = vmatpush1.msra.mxu0 0.0
    %154 = vmatprep.subr.mxu0 0.0
    %155 = vmatpush1.msra.mxu0 0.0
    %156 = vmatprep.subr.mxu0 0.0
    %157 = vmatpush1.msra.mxu0 0.0
    %158 = vmatprep.subr.mxu0 0.0
    %159 = vmatpush1.msra.mxu0 0.0
    %160 = vmatprep.subr.mxu0 0.0
    %161 = vmatpush1.msra.mxu0 0.0
    %162 = vmatprep.subr.mxu0 0.0
    %163 = vmatpush1.msra.mxu0 0.0
    %164 = vmatprep.subr.mxu0 0.0
    %165 = vmatpush1.msra.mxu0 0.0
    %166 = vmatprep.subr.mxu0 0.0
    %167 = vmatpush1.msra.mxu0 0.0
    %168 = vmatprep.subr.mxu0 0.0
    %169 = vmatpush1.msra.mxu0 0.0
    %170 = vmatprep.subr.mxu0 0.0
    %171 = vmatpush1.msra.mxu0 0.0
    %172 = vmatprep.subr.mxu0 0.0
    %173 = vmatpush1.msra.mxu0 0.0
    %174 = vmatprep.subr.mxu0 0.0
    %175 = vmatpush1.msra.mxu0 0.0
    %176 = vmatprep.subr.mxu0 0.0
    %177 = vmatpush1.msra.mxu0 0.0
    %178 = vmatprep.subr.mxu0 0.0
    %179 = vmatpush1.msra.mxu0 0.0
    %180 = vmatprep.subr.mxu0 0.0
    %181 = vmatpush1.msra.mxu0 0.0
    %182 = vmatprep.subr.mxu0 0.0
    %183 = vmatpush1.msra.mxu0 0.0
    %184 = vmatprep.subr.mxu0 0.0
    %185 = vmatpush1.msra.mxu0 0.0
    %186 = vmatprep.subr.mxu0 0.0
    %187 = vmatpush1.msra.mxu0 0.0
    %188 = vmatprep.subr.mxu0 0.0
    %189 = vmatpush1.msra.mxu0 0.0
    %190 = vmatprep.subr.mxu0 0.0
    %191 = vmatpush1.msra.mxu0 0.0
    %192 = vmatprep.mubr.f32.mxu0 0.0
    %193 = vmatmul.mubr.f32.gmra.mrb[0].mxu0 %v126
    %v194 = vpop.f32.mrb[0].mxu0
    %v195 = vadd.f32 0.0, %v194
    %v196 = vpop.f32.mrb[0].mxu0
    %197 = vdwg.mxu0
    %v198 = vadd.f32 %v123, %v195
    %vm199 = vcmask 253952
    %200 = vst.msk [vmem:[#allocation2] sm:$0x1] %vm199, %v198
    // Predicated region
    $region22: #{tpu_custom_call.1} parent=1 // pred_check
      %p201 = pneg %p31
    $region23: #{tpu_custom_call.1} parent=1 // pred_check_branch
      %203 = sbr.rel (%p201) target = $region25
    $region24: #{tpu_custom_call.1} parent=1 // pred_region
      %v204 = vld [vmem:[#allocation2] sm:$0x1]
      %205 = vst.msk [vmem:[#allocation8] sm:$0x1] %vm199, %v204
    $region25: #{tpu_custom_call.1} parent=1 // pred_fallthru
      _
    // Predicated region
    $region26: #{tpu_custom_call.1} parent=1 // pred_check
      _
    $region27: #{tpu_custom_call.1} parent=1 // pred_check_branch
      %207 = sbr.rel (0) target = $region29
    $region28: #{tpu_custom_call.1} parent=1 // pred_region
      %s209 = ssub.s32 16, 16
      %210 = vsyncadd [#allocation6], %s209
      %s212 = sshll.u32 [#allocation7], 4
      %s213 = int_to_ptr.vmem [resolvable:$true] %s212
      %215 = dma.vmem_to_hbm [thread:$0]  %s213, 16, %s3, [#allocation6]
    $region29: #{tpu_custom_call.1} parent=1 // pred_fallthru
      _
    // Predicated region
    $region30: #{tpu_custom_call.1} parent=1 // pred_check
      _
    $region31: #{tpu_custom_call.1} parent=1 // pred_check_branch
      %217 = sbr.rel (0) target = $region33
    $region32: #{tpu_custom_call.1} parent=1 // pred_region
      %s219 = ssub.s32 16, 16
      %220 = vsyncadd [#allocation9], %s219
      %s222 = sshll.u32 [#allocation8], 4
      %s223 = int_to_ptr.vmem [resolvable:$true] %s222
      %225 = dma.vmem_to_hbm [thread:$0]  %s223, 16, %s4, [#allocation9]
    $region33: #{tpu_custom_call.1} parent=1 // pred_fallthru
      _
    // Predicated region
    $region34: #{tpu_custom_call.1} parent=1 // pred_check
      _
    $region35: #{tpu_custom_call.1} parent=1 // pred_check_branch
      %227 = sbr.rel (0) target = $region37
    $region36: #{tpu_custom_call.1} parent=1 // pred_region
      %228 = dma.done [#allocation6], 16
    $region37: #{tpu_custom_call.1} parent=1 // pred_fallthru
      _
    // Predicated region
    $region38: #{tpu_custom_call.1} parent=1 // pred_check
      _
    $region39: #{tpu_custom_call.1} parent=1 // pred_check_branch
      %230 = sbr.rel (0) target = $region41
    $region40: #{tpu_custom_call.1} parent=1 // pred_region
      %231 = dma.done [#allocation9], 16
    $region41: #{tpu_custom_call.1} parent=1 // pred_fallthru
      _
    %232 = vsyncpa [#allocation5], 1
    %233 = vsyncpa [#allocation6], 1
    %234 = vsyncpa [#allocation9], 1

</llo_original>
